<compile_context>
chip_gen: v5e
topology: v5e:2x2
jax: 0.10.0
libtpu: 0.0.40
codegen_flags: <defaults>
</compile_context>

<pallas_src>
import functools
import math

import jax
import jax.numpy as jnp
from jax.experimental import pallas as pl
from jax.experimental.pallas import tpu as pltpu

# ----- dynamics constants (norse defaults + overrides from SNN.__init__) -----
DT = 0.001
TAU_SYN_INV = 200.0   # 1 / 5e-3  (norse default)
TAU_MEM_INV = 100.0   # 1 / 1e-2  (norse default)
V_TH = 0.5            # LIFParameters(v_th=0.5)
V_LEAK = 0.25         # LIFParameters(v_leak=0.25)
V_RESET = 0.0         # LIFParameters(v_reset=0.0)
LI_V_LEAK = 0.0       # LIParameters default
# alpha=1e-4 only affects the surrogate gradient (backward); forward spike is heaviside.

LANE = 128
SUBLANE = 8


def _round_up(n, m):
    return ((n + m - 1) // m) * m


def snn_chunk_kernel(xw_ref, wrec_t_ref, wout_t_ref, bout_ref, out_ref,
                     z_s, v_s, i_s, vo_s, io_s, zc_s):
    TB, Bp, _ = xw_ref.shape
    c = pl.program_id(0)

    # initialize carried state on the first chunk (s1 = so = None in PyTorch)
    @pl.when(c == 0)
    def _():
        z_s[...] = jnp.zeros_like(z_s)
        v_s[...] = jnp.full_like(v_s, V_LEAK)   # LIF initial v = v_leak
        i_s[...] = jnp.zeros_like(i_s)
        vo_s[...] = jnp.zeros_like(vo_s)        # LI initial v = 0
        io_s[...] = jnp.zeros_like(io_s)

    wrec_t = wrec_t_ref[...]                    # hoisted resident weight load

    z = z_s[...]
    v = v_s[...]
    i = i_s[...]

    # ---- LIF recurrence over the chunk (fully unrolled). Only the state-dependent
    #      z @ W_rec^T matmul stays on the sequential critical path; the input drive
    #      xw_ref[t] was precomputed outside the kernel. ----
    for t in range(TB):
        v_dec = v + DT * TAU_MEM_INV * ((V_LEAK - v) + i)
        i_dec = i * (1.0 - DT * TAU_SYN_INV)
        spike = v_dec > V_TH                                     # heaviside
        z_new = spike.astype(jnp.float32)
        i = (i_dec + xw_ref[t]
             + jnp.dot(z, wrec_t, preferred_element_type=jnp.float32))
        v = jnp.where(spike, V_RESET, v_dec)                     # reuse the compare
        z = z_new
        # ReLU(z_new) == z_new since z_new in {0,1}; stash for the batched readout.
        zc_s[pl.ds(t * Bp, Bp), :] = z_new

    z_s[...] = z
    v_s[...] = v
    i_s[...] = i

    # ---- batched readout: one (TB*Bp, Hp) x (Hp, Op) matmul + bias per chunk ----
    y_all = (jnp.dot(zc_s[...], wout_t_ref[...], preferred_element_type=jnp.float32)
             + bout_ref[...])

    # ---- LICell (weight-less leaky integrator): cheap (Bp, Op) VPU recurrence ----
    vo = vo_s[...]
    io = io_s[...]
    for t in range(TB):
        i_jump = io + y_all[t * Bp:(t + 1) * Bp, :]
        vo = vo + DT * TAU_MEM_INV * ((LI_V_LEAK - vo) + i_jump)
        io = i_jump * (1.0 - DT * TAU_SYN_INV)
        out_ref[t] = vo
    vo_s[...] = vo
    io_s[...] = io


@functools.partial(jax.jit, static_argnames=("time_block",))
def snn_forward(x, w_in, w_rec, w_out, b_out, *, time_block=8):
    """x: (T, B, I); w_in: (H, I); w_rec: (H, H); w_out: (O, H); b_out: (O,)."""
    T, B, I = x.shape
    H = w_in.shape[0]
    O = w_out.shape[0]

    TB = min(time_block, T)
    Tp = _round_up(T, TB)
    Bp = _round_up(B, SUBLANE)
    Hp = _round_up(H, LANE)
    Op = _round_up(O, LANE)

    x = x.astype(jnp.float32)

    # zero-padded, pre-transposed weights -> lane-dense row-major matmuls in-kernel.
    # Padded hidden units have zero in/rec/out weights and start at v_leak, so they
    # never spike and never influence real units; padded outputs stay identically 0.
    win_t = jnp.zeros((I, Hp), jnp.float32).at[:, :H].set(w_in.T.astype(jnp.float32))
    wrec_t = jnp.zeros((Hp, Hp), jnp.float32).at[:H, :H].set(w_rec.T.astype(jnp.float32))
    wout_t = jnp.zeros((Hp, Op), jnp.float32).at[:H, :O].set(w_out.T.astype(jnp.float32))
    bout = jnp.zeros((1, Op), jnp.float32).at[0, :O].set(b_out.astype(jnp.float32))

    x_pad = jnp.zeros((Tp, Bp, I), jnp.float32).at[:T, :B, :].set(x)

    # Hoisted, state-independent input projection for ALL timesteps: one big parallel
    # matmul off the sequential critical path (runs as a single XLA MXU op).
    xw = jnp.dot(x_pad.reshape(Tp * Bp, I), win_t,
                 preferred_element_type=jnp.float32).reshape(Tp, Bp, Hp)

    out = pl.pallas_call(
        snn_chunk_kernel,
        out_shape=jax.ShapeDtypeStruct((Tp, Bp, Op), jnp.float32),
        grid_spec=pltpu.PrefetchScalarGridSpec(
            num_scalar_prefetch=0,
            grid=(Tp // TB,),
            in_specs=[
                pl.BlockSpec((TB, Bp, Hp), lambda c: (c, 0, 0)),   # XW chunk
                pl.BlockSpec((Hp, Hp), lambda c: (0, 0)),          # W_rec^T (resident)
                pl.BlockSpec((Hp, Op), lambda c: (0, 0)),          # W_out^T (resident)
                pl.BlockSpec((1, Op), lambda c: (0, 0)),           # bias
            ],
            out_specs=pl.BlockSpec((TB, Bp, Op), lambda c: (c, 0, 0)),
            scratch_shapes=[
                pltpu.VMEM((Bp, Hp), jnp.float32),       # z   (LIF spikes)
                pltpu.VMEM((Bp, Hp), jnp.float32),       # v   (LIF membrane)
                pltpu.VMEM((Bp, Hp), jnp.float32),       # i   (LIF synaptic current)
                pltpu.VMEM((Bp, Op), jnp.float32),       # readout v (LI)
                pltpu.VMEM((Bp, Op), jnp.float32),       # readout i (LI)
                pltpu.VMEM((TB * Bp, Hp), jnp.float32),  # spike chunk for batched readout
            ],
        ),
        compiler_params=pltpu.CompilerParams(
            dimension_semantics=("arbitrary",)),   # sequential recurrence over time chunks
    )(xw, wrec_t, wout_t, bout)

    return out[:T, :B, :O]


def snn_reference(x, w_in, w_rec, w_out, b_out):
    """Pure-JAX reference (same equations as the PyTorch module) for correctness check."""
    T, B, I = x.shape
    H = w_in.shape[0]
    O = w_out.shape[0]

    def step(carry, x_t):
        z, v, i, vo, io = carry
        dv = DT * TAU_MEM_INV * ((V_LEAK - v) + i)
        v_dec = v + dv
        i_dec = i * (1.0 - DT * TAU_SYN_INV)
        z_new = (v_dec - V_TH > 0.0).astype(jnp.float32)
        v_new = (1.0 - z_new) * v_dec + z_new * V_RESET
        i_new = i_dec + x_t @ w_in.T + z @ w_rec.T
        a = jnp.maximum(z_new, 0.0)
        y = a @ w_out.T + b_out
        i_jump = io + y
        vo_new = vo + DT * TAU_MEM_INV * ((LI_V_LEAK - vo) + i_jump)
        io_new = i_jump * (1.0 - DT * TAU_SYN_INV)
        return (z_new, v_new, i_new, vo_new, io_new), vo_new

    init = (jnp.zeros((B, H)), jnp.full((B, H), V_LEAK), jnp.zeros((B, H)),
            jnp.zeros((B, O)), jnp.zeros((B, O)))
    _, vs = jax.lax.scan(step, init, x)
    return vs


if __name__ == "__main__":
    # module defaults: num_inputs=4, num_hidden=100, num_outputs=2; x is (seq, batch, inputs)
    T, B, I, H, O = 8, 2, 4, 100, 2

    key = jax.random.PRNGKey(0)
    k_x, k_win, k_wrec, k_wout, k_bout = jax.random.split(key, 5)

    x = jax.random.normal(k_x, (T, B, I), dtype=jnp.float32)

    # deterministic parameter init (shapes per LIFRecurrentCell / nn.Linear)
    w_in = jax.random.normal(k_win, (H, I), dtype=jnp.float32) * math.sqrt(2.0 / H)
    w_rec = jax.random.normal(k_wrec, (H, H), dtype=jnp.float32) * math.sqrt(2.0 / H)
    w_rec = w_rec * (1.0 - jnp.eye(H, dtype=jnp.float32))   # autapses=False: zero diagonal
    bound = 1.0 / math.sqrt(H)
    w_out = jax.random.uniform(k_wout, (O, H), dtype=jnp.float32, minval=-bound, maxval=bound)
    b_out = jax.random.uniform(k_bout, (O,), dtype=jnp.float32, minval=-bound, maxval=bound)

    voltages = jax.block_until_ready(snn_forward(x, w_in, w_rec, w_out, b_out))
    ref = jax.block_until_ready(snn_reference(x, w_in, w_rec, w_out, b_out))

    assert voltages.shape == (T, B, O), voltages.shape
    assert jnp.allclose(voltages, ref, atol=1e-5, rtol=1e-5), "mismatch vs JAX reference"

    # TODO(synk): `record=True` recording buffers (LIF z/v/i, LI v/i traces) not emitted;
    # only the stacked readout voltages (the module's return value) are produced.
    print("KERNEL_OK")
</pallas_src>

<mosaic_0001>
module attributes {stable_mosaic.version = 11 : i64} {
  func.func @snn_chunk_kernel(%arg0: i32, %arg1: memref<8x8x128xf32, #tpu.memory_space<vmem>>, %arg2: memref<128x128xf32, #tpu.memory_space<vmem>>, %arg3: memref<128x128xf32, #tpu.memory_space<vmem>>, %arg4: memref<1x128xf32, #tpu.memory_space<vmem>>, %arg5: memref<8x8x128xf32, #tpu.memory_space<vmem>>, %arg6: memref<8x128xf32, #tpu.memory_space<vmem>>, %arg7: memref<8x128xf32, #tpu.memory_space<vmem>>, %arg8: memref<8x128xf32, #tpu.memory_space<vmem>>, %arg9: memref<8x128xf32, #tpu.memory_space<vmem>>, %arg10: memref<8x128xf32, #tpu.memory_space<vmem>>, %arg11: memref<64x128xf32, #tpu.memory_space<vmem>>) attributes {dimension_semantics = [#tpu.dimension_semantics<arbitrary>], iteration_bounds = array<i64: 1>, scalar_prefetch = 0 : i64, scratch_operands = 6 : i64, tpu.core_type = #tpu.core_type<tc>, window_params = [{transform_indices = @transform_0, window_bounds = array<i64: 8, 8, 128>}, {pipeline_mode = #tpu.pipeline_mode<synchronous>, transform_indices = @transform_1, window_bounds = array<i64: 128, 128>}, {pipeline_mode = #tpu.pipeline_mode<synchronous>, transform_indices = @transform_2, window_bounds = array<i64: 128, 128>}, {pipeline_mode = #tpu.pipeline_mode<synchronous>, transform_indices = @transform_3, window_bounds = array<i64: 1, 128>}, {transform_indices = @transform_4, window_bounds = array<i64: 8, 8, 128>}]} {
    %c0_i32 = arith.constant 0 : i32
    %0 = arith.cmpi eq, %arg0, %c0_i32 : i32
    %1 = arith.extui %0 : i1 to i32
    %c0_i32_0 = arith.constant 0 : i32
    %2 = arith.cmpi ne, %1, %c0_i32_0 : i32
    scf.if %2 {
      %cst_150 = arith.constant 0.000000e+00 : f32
      %284 = vector.broadcast %cst_150 : f32 to vector<8x128xf32>
      %c0_151 = arith.constant 0 : index
      %c0_152 = arith.constant 0 : index
      %285 = vector.load %arg6[%c0_151, %c0_152] : memref<8x128xf32, #tpu.memory_space<vmem>>, vector<8x128xf32>
      tpu.vector_store %arg6[%c0_151, %c0_152], %284 {strides = array<i32>} : memref<8x128xf32, #tpu.memory_space<vmem>>, vector<8x128xf32>,
      %cst_153 = arith.constant 2.500000e-01 : f32
      %286 = vector.broadcast %cst_153 : f32 to vector<8x128xf32>
      %c0_154 = arith.constant 0 : index
      %c0_155 = arith.constant 0 : index
      %287 = vector.load %arg7[%c0_154, %c0_155] : memref<8x128xf32, #tpu.memory_space<vmem>>, vector<8x128xf32>
      tpu.vector_store %arg7[%c0_154, %c0_155], %286 {strides = array<i32>} : memref<8x128xf32, #tpu.memory_space<vmem>>, vector<8x128xf32>,
      %cst_156 = arith.constant 0.000000e+00 : f32
      %288 = vector.broadcast %cst_156 : f32 to vector<8x128xf32>
      %c0_157 = arith.constant 0 : index
      %c0_158 = arith.constant 0 : index
      %289 = vector.load %arg8[%c0_157, %c0_158] : memref<8x128xf32, #tpu.memory_space<vmem>>, vector<8x128xf32>
      tpu.vector_store %arg8[%c0_157, %c0_158], %288 {strides = array<i32>} : memref<8x128xf32, #tpu.memory_space<vmem>>, vector<8x128xf32>,
      %cst_159 = arith.constant 0.000000e+00 : f32
      %290 = vector.broadcast %cst_159 : f32 to vector<8x128xf32>
      %c0_160 = arith.constant 0 : index
      %c0_161 = arith.constant 0 : index
      %291 = vector.load %arg9[%c0_160, %c0_161] : memref<8x128xf32, #tpu.memory_space<vmem>>, vector<8x128xf32>
      tpu.vector_store %arg9[%c0_160, %c0_161], %290 {strides = array<i32>} : memref<8x128xf32, #tpu.memory_space<vmem>>, vector<8x128xf32>,
      %cst_162 = arith.constant 0.000000e+00 : f32
      %292 = vector.broadcast %cst_162 : f32 to vector<8x128xf32>
      %c0_163 = arith.constant 0 : index
      %c0_164 = arith.constant 0 : index
      %293 = vector.load %arg10[%c0_163, %c0_164] : memref<8x128xf32, #tpu.memory_space<vmem>>, vector<8x128xf32>
      tpu.vector_store %arg10[%c0_163, %c0_164], %292 {strides = array<i32>} : memref<8x128xf32, #tpu.memory_space<vmem>>, vector<8x128xf32>,
    } else {
    }
    %c0 = arith.constant 0 : index
    %c0_1 = arith.constant 0 : index
    %3 = vector.load %arg2[%c0, %c0_1] : memref<128x128xf32, #tpu.memory_space<vmem>>, vector<128x128xf32>
    %c0_2 = arith.constant 0 : index
    %c0_3 = arith.constant 0 : index
    %4 = vector.load %arg6[%c0_2, %c0_3] : memref<8x128xf32, #tpu.memory_space<vmem>>, vector<8x128xf32>
    %c0_4 = arith.constant 0 : index
    %c0_5 = arith.constant 0 : index
    %5 = vector.load %arg7[%c0_4, %c0_5] : memref<8x128xf32, #tpu.memory_space<vmem>>, vector<8x128xf32>
    %c0_6 = arith.constant 0 : index
    %c0_7 = arith.constant 0 : index
    %6 = vector.load %arg8[%c0_6, %c0_7] : memref<8x128xf32, #tpu.memory_space<vmem>>, vector<8x128xf32>
    %cst = arith.constant 2.500000e-01 : f32
    %7 = vector.broadcast %cst : f32 to vector<8x128xf32>
    %8 = arith.subf %7, %5 : vector<8x128xf32>
    %9 = arith.addf %8, %6 : vector<8x128xf32>
    %cst_8 = arith.constant 1.000000e-01 : f32
    %10 = vector.broadcast %cst_8 : f32 to vector<8x128xf32>
    %11 = arith.mulf %10, %9 : vector<8x128xf32>
    %12 = arith.addf %5, %11 : vector<8x128xf32>
    %cst_9 = arith.constant 8.000000e-01 : f32
    %13 = vector.broadcast %cst_9 : f32 to vector<8x128xf32>
    %14 = arith.mulf %6, %13 : vector<8x128xf32>
    %cst_10 = arith.constant 5.000000e-01 : f32
    %15 = vector.broadcast %cst_10 : f32 to vector<8x128xf32>
    %16 = arith.cmpf ogt, %12, %15 : vector<8x128xf32>
    %17 = arith.extui %16 : vector<8x128xi1> to vector<8x128xi32>
    %18 = arith.sitofp %17 : vector<8x128xi32> to vector<8x128xf32>
    %c0_11 = arith.constant 0 : index
    %c0_12 = arith.constant 0 : index
    %c0_13 = arith.constant 0 : index
    %19 = vector.load %arg1[%c0_11, %c0_12, %c0_13] : memref<8x8x128xf32, #tpu.memory_space<vmem>>, vector<1x8x128xf32>
    %20 = vector.shape_cast %19 : vector<1x8x128xf32> to vector<8x128xf32>
    %21 = arith.addf %14, %20 : vector<8x128xf32>
    %cst_14 = arith.constant dense<0.000000e+00> : vector<8x128xf32>
    %22 = tpu.matmul %4, %3, %cst_14 {dimension_numbers = #tpu.dot_dimension_numbers<[1], [0], [0], [1], [0, 0, 1, 1], [], []>} : vector<8x128xf32>, vector<128x128xf32>, vector<8x128xf32> -> vector<8x128xf32>
    %23 = arith.addf %21, %22 : vector<8x128xf32>
    %cst_15 = arith.constant 0.000000e+00 : f32
    %24 = vector.broadcast %cst_15 : f32 to vector<8x128xf32>
    %25 = arith.select %16, %24, %12 : vector<8x128xi1>, vector<8x128xf32>
    %c0_16 = arith.constant 0 : index
    %c0_17 = arith.constant 0 : index
    %26 = vector.load %arg11[%c0_16, %c0_17] : memref<64x128xf32, #tpu.memory_space<vmem>>, vector<8x128xf32>
    tpu.vector_store %arg11[%c0_16, %c0_17], %18 {strides = array<i32>} : memref<64x128xf32, #tpu.memory_space<vmem>>, vector<8x128xf32>,
    %cst_18 = arith.constant 2.500000e-01 : f32
    %27 = vector.broadcast %cst_18 : f32 to vector<8x128xf32>
    %28 = arith.subf %27, %25 : vector<8x128xf32>
    %29 = arith.addf %28, %23 : vector<8x128xf32>
    %cst_19 = arith.constant 1.000000e-01 : f32
    %30 = vector.broadcast %cst_19 : f32 to vector<8x128xf32>
    %31 = arith.mulf %30, %29 : vector<8x128xf32>
    %32 = arith.addf %25, %31 : vector<8x128xf32>
    %cst_20 = arith.constant 8.000000e-01 : f32
    %33 = vector.broadcast %cst_20 : f32 to vector<8x128xf32>
    %34 = arith.mulf %23, %33 : vector<8x128xf32>
    %cst_21 = arith.constant 5.000000e-01 : f32
    %35 = vector.broadcast %cst_21 : f32 to vector<8x128xf32>
    %36 = arith.cmpf ogt, %32, %35 : vector<8x128xf32>
    %37 = arith.extui %36 : vector<8x128xi1> to vector<8x128xi32>
    %38 = arith.sitofp %37 : vector<8x128xi32> to vector<8x128xf32>
    %c1 = arith.constant 1 : index
    %c0_22 = arith.constant 0 : index
    %c0_23 = arith.constant 0 : index
    %39 = vector.load %arg1[%c1, %c0_22, %c0_23] : memref<8x8x128xf32, #tpu.memory_space<vmem>>, vector<1x8x128xf32>
    %40 = vector.shape_cast %39 : vector<1x8x128xf32> to vector<8x128xf32>
    %41 = arith.addf %34, %40 : vector<8x128xf32>
    %cst_24 = arith.constant dense<0.000000e+00> : vector<8x128xf32>
    %42 = tpu.matmul %18, %3, %cst_24 {dimension_numbers = #tpu.dot_dimension_numbers<[1], [0], [0], [1], [0, 0, 1, 1], [], []>} : vector<8x128xf32>, vector<128x128xf32>, vector<8x128xf32> -> vector<8x128xf32>
    %43 = arith.addf %41, %42 : vector<8x128xf32>
    %cst_25 = arith.constant 0.000000e+00 : f32
    %44 = vector.broadcast %cst_25 : f32 to vector<8x128xf32>
    %45 = arith.select %36, %44, %32 : vector<8x128xi1>, vector<8x128xf32>
    %c8 = arith.constant 8 : index
    %c0_26 = arith.constant 0 : index
    %46 = vector.load %arg11[%c8, %c0_26] : memref<64x128xf32, #tpu.memory_space<vmem>>, vector<8x128xf32>
    tpu.vector_store %arg11[%c8, %c0_26], %38 {strides = array<i32>} : memref<64x128xf32, #tpu.memory_space<vmem>>, vector<8x128xf32>,
    %cst_27 = arith.constant 2.500000e-01 : f32
    %47 = vector.broadcast %cst_27 : f32 to vector<8x128xf32>
    %48 = arith.subf %47, %45 : vector<8x128xf32>
    %49 = arith.addf %48, %43 : vector<8x128xf32>
    %cst_28 = arith.constant 1.000000e-01 : f32
    %50 = vector.broadcast %cst_28 : f32 to vector<8x128xf32>
    %51 = arith.mulf %50, %49 : vector<8x128xf32>
    %52 = arith.addf %45, %51 : vector<8x128xf32>
    %cst_29 = arith.constant 8.000000e-01 : f32
    %53 = vector.broadcast %cst_29 : f32 to vector<8x128xf32>
    %54 = arith.mulf %43, %53 : vector<8x128xf32>
    %cst_30 = arith.constant 5.000000e-01 : f32
    %55 = vector.broadcast %cst_30 : f32 to vector<8x128xf32>
    %56 = arith.cmpf ogt, %52, %55 : vector<8x128xf32>
    %57 = arith.extui %56 : vector<8x128xi1> to vector<8x128xi32>
    %58 = arith.sitofp %57 : vector<8x128xi32> to vector<8x128xf32>
    %c2 = arith.constant 2 : index
    %c0_31 = arith.constant 0 : index
    %c0_32 = arith.constant 0 : index
    %59 = vector.load %arg1[%c2, %c0_31, %c0_32] : memref<8x8x128xf32, #tpu.memory_space<vmem>>, vector<1x8x128xf32>
    %60 = vector.shape_cast %59 : vector<1x8x128xf32> to vector<8x128xf32>
    %61 = arith.addf %54, %60 : vector<8x128xf32>
    %cst_33 = arith.constant dense<0.000000e+00> : vector<8x128xf32>
    %62 = tpu.matmul %38, %3, %cst_33 {dimension_numbers = #tpu.dot_dimension_numbers<[1], [0], [0], [1], [0, 0, 1, 1], [], []>} : vector<8x128xf32>, vector<128x128xf32>, vector<8x128xf32> -> vector<8x128xf32>
    %63 = arith.addf %61, %62 : vector<8x128xf32>
    %cst_34 = arith.constant 0.000000e+00 : f32
    %64 = vector.broadcast %cst_34 : f32 to vector<8x128xf32>
    %65 = arith.select %56, %64, %52 : vector<8x128xi1>, vector<8x128xf32>
    %c16 = arith.constant 16 : index
    %c0_35 = arith.constant 0 : index
    %66 = vector.load %arg11[%c16, %c0_35] : memref<64x128xf32, #tpu.memory_space<vmem>>, vector<8x128xf32>
    tpu.vector_store %arg11[%c16, %c0_35], %58 {strides = array<i32>} : memref<64x128xf32, #tpu.memory_space<vmem>>, vector<8x128xf32>,
    %cst_36 = arith.constant 2.500000e-01 : f32
    %67 = vector.broadcast %cst_36 : f32 to vector<8x128xf32>
    %68 = arith.subf %67, %65 : vector<8x128xf32>
    %69 = arith.addf %68, %63 : vector<8x128xf32>
    %cst_37 = arith.constant 1.000000e-01 : f32
    %70 = vector.broadcast %cst_37 : f32 to vector<8x128xf32>
    %71 = arith.mulf %70, %69 : vector<8x128xf32>
    %72 = arith.addf %65, %71 : vector<8x128xf32>
    %cst_38 = arith.constant 8.000000e-01 : f32
    %73 = vector.broadcast %cst_38 : f32 to vector<8x128xf32>
    %74 = arith.mulf %63, %73 : vector<8x128xf32>
    %cst_39 = arith.constant 5.000000e-01 : f32
    %75 = vector.broadcast %cst_39 : f32 to vector<8x128xf32>
    %76 = arith.cmpf ogt, %72, %75 : vector<8x128xf32>
    %77 = arith.extui %76 : vector<8x128xi1> to vector<8x128xi32>
    %78 = arith.sitofp %77 : vector<8x128xi32> to vector<8x128xf32>
    %c3 = arith.constant 3 : index
    %c0_40 = arith.constant 0 : index
    %c0_41 = arith.constant 0 : index
    %79 = vector.load %arg1[%c3, %c0_40, %c0_41] : memref<8x8x128xf32, #tpu.memory_space<vmem>>, vector<1x8x128xf32>
    %80 = vector.shape_cast %79 : vector<1x8x128xf32> to vector<8x128xf32>
    %81 = arith.addf %74, %80 : vector<8x128xf32>
    %cst_42 = arith.constant dense<0.000000e+00> : vector<8x128xf32>
    %82 = tpu.matmul %58, %3, %cst_42 {dimension_numbers = #tpu.dot_dimension_numbers<[1], [0], [0], [1], [0, 0, 1, 1], [], []>} : vector<8x128xf32>, vector<128x128xf32>, vector<8x128xf32> -> vector<8x128xf32>
    %83 = arith.addf %81, %82 : vector<8x128xf32>
    %cst_43 = arith.constant 0.000000e+00 : f32
    %84 = vector.broadcast %cst_43 : f32 to vector<8x128xf32>
    %85 = arith.select %76, %84, %72 : vector<8x128xi1>, vector<8x128xf32>
    %c24 = arith.constant 24 : index
    %c0_44 = arith.constant 0 : index
    %86 = vector.load %arg11[%c24, %c0_44] : memref<64x128xf32, #tpu.memory_space<vmem>>, vector<8x128xf32>
    tpu.vector_store %arg11[%c24, %c0_44], %78 {strides = array<i32>} : memref<64x128xf32, #tpu.memory_space<vmem>>, vector<8x128xf32>,
    %cst_45 = arith.constant 2.500000e-01 : f32
    %87 = vector.broadcast %cst_45 : f32 to vector<8x128xf32>
    %88 = arith.subf %87, %85 : vector<8x128xf32>
    %89 = arith.addf %88, %83 : vector<8x128xf32>
    %cst_46 = arith.constant 1.000000e-01 : f32
    %90 = vector.broadcast %cst_46 : f32 to vector<8x128xf32>
    %91 = arith.mulf %90, %89 : vector<8x128xf32>
    %92 = arith.addf %85, %91 : vector<8x128xf32>
    %cst_47 = arith.constant 8.000000e-01 : f32
    %93 = vector.broadcast %cst_47 : f32 to vector<8x128xf32>
    %94 = arith.mulf %83, %93 : vector<8x128xf32>
    %cst_48 = arith.constant 5.000000e-01 : f32
    %95 = vector.broadcast %cst_48 : f32 to vector<8x128xf32>
    %96 = arith.cmpf ogt, %92, %95 : vector<8x128xf32>
    %97 = arith.extui %96 : vector<8x128xi1> to vector<8x128xi32>
    %98 = arith.sitofp %97 : vector<8x128xi32> to vector<8x128xf32>
    %c4 = arith.constant 4 : index
    %c0_49 = arith.constant 0 : index
    %c0_50 = arith.constant 0 : index
    %99 = vector.load %arg1[%c4, %c0_49, %c0_50] : memref<8x8x128xf32, #tpu.memory_space<vmem>>, vector<1x8x128xf32>
    %100 = vector.shape_cast %99 : vector<1x8x128xf32> to vector<8x128xf32>
    %101 = arith.addf %94, %100 : vector<8x128xf32>
    %cst_51 = arith.constant dense<0.000000e+00> : vector<8x128xf32>
    %102 = tpu.matmul %78, %3, %cst_51 {dimension_numbers = #tpu.dot_dimension_numbers<[1], [0], [0], [1], [0, 0, 1, 1], [], []>} : vector<8x128xf32>, vector<128x128xf32>, vector<8x128xf32> -> vector<8x128xf32>
    %103 = arith.addf %101, %102 : vector<8x128xf32>
    %cst_52 = arith.constant 0.000000e+00 : f32
    %104 = vector.broadcast %cst_52 : f32 to vector<8x128xf32>
    %105 = arith.select %96, %104, %92 : vector<8x128xi1>, vector<8x128xf32>
    %c32 = arith.constant 32 : index
    %c0_53 = arith.constant 0 : index
    %106 = vector.load %arg11[%c32, %c0_53] : memref<64x128xf32, #tpu.memory_space<vmem>>, vector<8x128xf32>
    tpu.vector_store %arg11[%c32, %c0_53], %98 {strides = array<i32>} : memref<64x128xf32, #tpu.memory_space<vmem>>, vector<8x128xf32>,
    %cst_54 = arith.constant 2.500000e-01 : f32
    %107 = vector.broadcast %cst_54 : f32 to vector<8x128xf32>
    %108 = arith.subf %107, %105 : vector<8x128xf32>
    %109 = arith.addf %108, %103 : vector<8x128xf32>
    %cst_55 = arith.constant 1.000000e-01 : f32
    %110 = vector.broadcast %cst_55 : f32 to vector<8x128xf32>
    %111 = arith.mulf %110, %109 : vector<8x128xf32>
    %112 = arith.addf %105, %111 : vector<8x128xf32>
    %cst_56 = arith.constant 8.000000e-01 : f32
    %113 = vector.broadcast %cst_56 : f32 to vector<8x128xf32>
    %114 = arith.mulf %103, %113 : vector<8x128xf32>
    %cst_57 = arith.constant 5.000000e-01 : f32
    %115 = vector.broadcast %cst_57 : f32 to vector<8x128xf32>
    %116 = arith.cmpf ogt, %112, %115 : vector<8x128xf32>
    %117 = arith.extui %116 : vector<8x128xi1> to vector<8x128xi32>
    %118 = arith.sitofp %117 : vector<8x128xi32> to vector<8x128xf32>
    %c5 = arith.constant 5 : index
    %c0_58 = arith.constant 0 : index
    %c0_59 = arith.constant 0 : index
    %119 = vector.load %arg1[%c5, %c0_58, %c0_59] : memref<8x8x128xf32, #tpu.memory_space<vmem>>, vector<1x8x128xf32>
    %120 = vector.shape_cast %119 : vector<1x8x128xf32> to vector<8x128xf32>
    %121 = arith.addf %114, %120 : vector<8x128xf32>
    %cst_60 = arith.constant dense<0.000000e+00> : vector<8x128xf32>
    %122 = tpu.matmul %98, %3, %cst_60 {dimension_numbers = #tpu.dot_dimension_numbers<[1], [0], [0], [1], [0, 0, 1, 1], [], []>} : vector<8x128xf32>, vector<128x128xf32>, vector<8x128xf32> -> vector<8x128xf32>
    %123 = arith.addf %121, %122 : vector<8x128xf32>
    %cst_61 = arith.constant 0.000000e+00 : f32
    %124 = vector.broadcast %cst_61 : f32 to vector<8x128xf32>
    %125 = arith.select %116, %124, %112 : vector<8x128xi1>, vector<8x128xf32>
    %c40 = arith.constant 40 : index
    %c0_62 = arith.constant 0 : index
    %126 = vector.load %arg11[%c40, %c0_62] : memref<64x128xf32, #tpu.memory_space<vmem>>, vector<8x128xf32>
    tpu.vector_store %arg11[%c40, %c0_62], %118 {strides = array<i32>} : memref<64x128xf32, #tpu.memory_space<vmem>>, vector<8x128xf32>,
    %cst_63 = arith.constant 2.500000e-01 : f32
    %127 = vector.broadcast %cst_63 : f32 to vector<8x128xf32>
    %128 = arith.subf %127, %125 : vector<8x128xf32>
    %129 = arith.addf %128, %123 : vector<8x128xf32>
    %cst_64 = arith.constant 1.000000e-01 : f32
    %130 = vector.broadcast %cst_64 : f32 to vector<8x128xf32>
    %131 = arith.mulf %130, %129 : vector<8x128xf32>
    %132 = arith.addf %125, %131 : vector<8x128xf32>
    %cst_65 = arith.constant 8.000000e-01 : f32
    %133 = vector.broadcast %cst_65 : f32 to vector<8x128xf32>
    %134 = arith.mulf %123, %133 : vector<8x128xf32>
    %cst_66 = arith.constant 5.000000e-01 : f32
    %135 = vector.broadcast %cst_66 : f32 to vector<8x128xf32>
    %136 = arith.cmpf ogt, %132, %135 : vector<8x128xf32>
    %137 = arith.extui %136 : vector<8x128xi1> to vector<8x128xi32>
    %138 = arith.sitofp %137 : vector<8x128xi32> to vector<8x128xf32>
    %c6 = arith.constant 6 : index
    %c0_67 = arith.constant 0 : index
    %c0_68 = arith.constant 0 : index
    %139 = vector.load %arg1[%c6, %c0_67, %c0_68] : memref<8x8x128xf32, #tpu.memory_space<vmem>>, vector<1x8x128xf32>
    %140 = vector.shape_cast %139 : vector<1x8x128xf32> to vector<8x128xf32>
    %141 = arith.addf %134, %140 : vector<8x128xf32>
    %cst_69 = arith.constant dense<0.000000e+00> : vector<8x128xf32>
    %142 = tpu.matmul %118, %3, %cst_69 {dimension_numbers = #tpu.dot_dimension_numbers<[1], [0], [0], [1], [0, 0, 1, 1], [], []>} : vector<8x128xf32>, vector<128x128xf32>, vector<8x128xf32> -> vector<8x128xf32>
    %143 = arith.addf %141, %142 : vector<8x128xf32>
    %cst_70 = arith.constant 0.000000e+00 : f32
    %144 = vector.broadcast %cst_70 : f32 to vector<8x128xf32>
    %145 = arith.select %136, %144, %132 : vector<8x128xi1>, vector<8x128xf32>
    %c48 = arith.constant 48 : index
    %c0_71 = arith.constant 0 : index
    %146 = vector.load %arg11[%c48, %c0_71] : memref<64x128xf32, #tpu.memory_space<vmem>>, vector<8x128xf32>
    tpu.vector_store %arg11[%c48, %c0_71], %138 {strides = array<i32>} : memref<64x128xf32, #tpu.memory_space<vmem>>, vector<8x128xf32>,
    %cst_72 = arith.constant 2.500000e-01 : f32
    %147 = vector.broadcast %cst_72 : f32 to vector<8x128xf32>
    %148 = arith.subf %147, %145 : vector<8x128xf32>
    %149 = arith.addf %148, %143 : vector<8x128xf32>
    %cst_73 = arith.constant 1.000000e-01 : f32
    %150 = vector.broadcast %cst_73 : f32 to vector<8x128xf32>
    %151 = arith.mulf %150, %149 : vector<8x128xf32>
    %152 = arith.addf %145, %151 : vector<8x128xf32>
    %cst_74 = arith.constant 8.000000e-01 : f32
    %153 = vector.broadcast %cst_74 : f32 to vector<8x128xf32>
    %154 = arith.mulf %143, %153 : vector<8x128xf32>
    %cst_75 = arith.constant 5.000000e-01 : f32
    %155 = vector.broadcast %cst_75 : f32 to vector<8x128xf32>
    %156 = arith.cmpf ogt, %152, %155 : vector<8x128xf32>
    %157 = arith.extui %156 : vector<8x128xi1> to vector<8x128xi32>
    %158 = arith.sitofp %157 : vector<8x128xi32> to vector<8x128xf32>
    %c7 = arith.constant 7 : index
    %c0_76 = arith.constant 0 : index
    %c0_77 = arith.constant 0 : index
    %159 = vector.load %arg1[%c7, %c0_76, %c0_77] : memref<8x8x128xf32, #tpu.memory_space<vmem>>, vector<1x8x128xf32>
    %160 = vector.shape_cast %159 : vector<1x8x128xf32> to vector<8x128xf32>
    %161 = arith.addf %154, %160 : vector<8x128xf32>
    %cst_78 = arith.constant dense<0.000000e+00> : vector<8x128xf32>
    %162 = tpu.matmul %138, %3, %cst_78 {dimension_numbers = #tpu.dot_dimension_numbers<[1], [0], [0], [1], [0, 0, 1, 1], [], []>} : vector<8x128xf32>, vector<128x128xf32>, vector<8x128xf32> -> vector<8x128xf32>
    %163 = arith.addf %161, %162 : vector<8x128xf32>
    %cst_79 = arith.constant 0.000000e+00 : f32
    %164 = vector.broadcast %cst_79 : f32 to vector<8x128xf32>
    %165 = arith.select %156, %164, %152 : vector<8x128xi1>, vector<8x128xf32>
    %c56 = arith.constant 56 : index
    %c0_80 = arith.constant 0 : index
    %166 = vector.load %arg11[%c56, %c0_80] : memref<64x128xf32, #tpu.memory_space<vmem>>, vector<8x128xf32>
    tpu.vector_store %arg11[%c56, %c0_80], %158 {strides = array<i32>} : memref<64x128xf32, #tpu.memory_space<vmem>>, vector<8x128xf32>,
    %c0_81 = arith.constant 0 : index
    %c0_82 = arith.constant 0 : index
    %167 = vector.load %arg6[%c0_81, %c0_82] : memref<8x128xf32, #tpu.memory_space<vmem>>, vector<8x128xf32>
    tpu.vector_store %arg6[%c0_81, %c0_82], %158 {strides = array<i32>} : memref<8x128xf32, #tpu.memory_space<vmem>>, vector<8x128xf32>,
    %c0_83 = arith.constant 0 : index
    %c0_84 = arith.constant 0 : index
    %168 = vector.load %arg7[%c0_83, %c0_84] : memref<8x128xf32, #tpu.memory_space<vmem>>, vector<8x128xf32>
    tpu.vector_store %arg7[%c0_83, %c0_84], %165 {strides = array<i32>} : memref<8x128xf32, #tpu.memory_space<vmem>>, vector<8x128xf32>,
    %c0_85 = arith.constant 0 : index
    %c0_86 = arith.constant 0 : index
    %169 = vector.load %arg8[%c0_85, %c0_86] : memref<8x128xf32, #tpu.memory_space<vmem>>, vector<8x128xf32>
    tpu.vector_store %arg8[%c0_85, %c0_86], %163 {strides = array<i32>} : memref<8x128xf32, #tpu.memory_space<vmem>>, vector<8x128xf32>,
    %c0_87 = arith.constant 0 : index
    %c0_88 = arith.constant 0 : index
    %170 = vector.load %arg11[%c0_87, %c0_88] : memref<64x128xf32, #tpu.memory_space<vmem>>, vector<64x128xf32>
    %c0_89 = arith.constant 0 : index
    %c0_90 = arith.constant 0 : index
    %171 = vector.load %arg3[%c0_89, %c0_90] : memref<128x128xf32, #tpu.memory_space<vmem>>, vector<128x128xf32>
    %cst_91 = arith.constant dense<0.000000e+00> : vector<64x128xf32>
    %172 = tpu.matmul %170, %171, %cst_91 {dimension_numbers = #tpu.dot_dimension_numbers<[1], [0], [0], [1], [0, 0, 1, 1], [], []>} : vector<64x128xf32>, vector<128x128xf32>, vector<64x128xf32> -> vector<64x128xf32>
    %c0_92 = arith.constant 0 : index
    %c0_93 = arith.constant 0 : index
    %173 = vector.load %arg4[%c0_92, %c0_93] : memref<1x128xf32, #tpu.memory_space<vmem>>, vector<1x128xf32>
    %174 = vector.broadcast %173 : vector<1x128xf32> to vector<64x128xf32>
    %175 = arith.addf %172, %174 : vector<64x128xf32>
    %c0_94 = arith.constant 0 : index
    %c0_95 = arith.constant 0 : index
    %176 = vector.load %arg9[%c0_94, %c0_95] : memref<8x128xf32, #tpu.memory_space<vmem>>, vector<8x128xf32>
    %c0_96 = arith.constant 0 : index
    %c0_97 = arith.constant 0 : index
    %177 = vector.load %arg10[%c0_96, %c0_97] : memref<8x128xf32, #tpu.memory_space<vmem>>, vector<8x128xf32>
    %178 = vector.extract_strided_slice %175 {offsets = [0, 0], sizes = [8, 128], strides = [1, 1]} : vector<64x128xf32> to vector<8x128xf32>
    %179 = arith.addf %177, %178 : vector<8x128xf32>
    %cst_98 = arith.constant 0.000000e+00 : f32
    %180 = vector.broadcast %cst_98 : f32 to vector<8x128xf32>
    %181 = arith.subf %180, %176 : vector<8x128xf32>
    %182 = arith.addf %181, %179 : vector<8x128xf32>
    %cst_99 = arith.constant 1.000000e-01 : f32
    %183 = vector.broadcast %cst_99 : f32 to vector<8x128xf32>
    %184 = arith.mulf %183, %182 : vector<8x128xf32>
    %185 = arith.addf %176, %184 : vector<8x128xf32>
    %cst_100 = arith.constant 8.000000e-01 : f32
    %186 = vector.broadcast %cst_100 : f32 to vector<8x128xf32>
    %187 = arith.mulf %179, %186 : vector<8x128xf32>
    %c0_101 = arith.constant 0 : index
    %c0_102 = arith.constant 0 : index
    %c0_103 = arith.constant 0 : index
    %188 = vector.load %arg5[%c0_101, %c0_102, %c0_103] : memref<8x8x128xf32, #tpu.memory_space<vmem>>, vector<1x8x128xf32>
    %189 = vector.shape_cast %188 : vector<1x8x128xf32> to vector<8x128xf32>
    %190 = vector.shape_cast %185 : vector<8x128xf32> to vector<1x8x128xf32>
    tpu.vector_store %arg5[%c0_101, %c0_102, %c0_103], %190 {strides = array<i32>} : memref<8x8x128xf32, #tpu.memory_space<vmem>>, vector<1x8x128xf32>,
    %191 = vector.extract_strided_slice %175 {offsets = [8, 0], sizes = [8, 128], strides = [1, 1]} : vector<64x128xf32> to vector<8x128xf32>
    %192 = arith.addf %187, %191 : vector<8x128xf32>
    %cst_104 = arith.constant 0.000000e+00 : f32
    %193 = vector.broadcast %cst_104 : f32 to vector<8x128xf32>
    %194 = arith.subf %193, %185 : vector<8x128xf32>
    %195 = arith.addf %194, %192 : vector<8x128xf32>
    %cst_105 = arith.constant 1.000000e-01 : f32
    %196 = vector.broadcast %cst_105 : f32 to vector<8x128xf32>
    %197 = arith.mulf %196, %195 : vector<8x128xf32>
    %198 = arith.addf %185, %197 : vector<8x128xf32>
    %cst_106 = arith.constant 8.000000e-01 : f32
    %199 = vector.broadcast %cst_106 : f32 to vector<8x128xf32>
    %200 = arith.mulf %192, %199 : vector<8x128xf32>
    %c1_107 = arith.constant 1 : index
    %c0_108 = arith.constant 0 : index
    %c0_109 = arith.constant 0 : index
    %201 = vector.load %arg5[%c1_107, %c0_108, %c0_109] : memref<8x8x128xf32, #tpu.memory_space<vmem>>, vector<1x8x128xf32>
    %202 = vector.shape_cast %201 : vector<1x8x128xf32> to vector<8x128xf32>
    %203 = vector.shape_cast %198 : vector<8x128xf32> to vector<1x8x128xf32>
    tpu.vector_store %arg5[%c1_107, %c0_108, %c0_109], %203 {strides = array<i32>} : memref<8x8x128xf32, #tpu.memory_space<vmem>>, vector<1x8x128xf32>,
    %204 = vector.extract_strided_slice %175 {offsets = [16, 0], sizes = [8, 128], strides = [1, 1]} : vector<64x128xf32> to vector<8x128xf32>
    %205 = arith.addf %200, %204 : vector<8x128xf32>
    %cst_110 = arith.constant 0.000000e+00 : f32
    %206 = vector.broadcast %cst_110 : f32 to vector<8x128xf32>
    %207 = arith.subf %206, %198 : vector<8x128xf32>
    %208 = arith.addf %207, %205 : vector<8x128xf32>
    %cst_111 = arith.constant 1.000000e-01 : f32
    %209 = vector.broadcast %cst_111 : f32 to vector<8x128xf32>
    %210 = arith.mulf %209, %208 : vector<8x128xf32>
    %211 = arith.addf %198, %210 : vector<8x128xf32>
    %cst_112 = arith.constant 8.000000e-01 : f32
    %212 = vector.broadcast %cst_112 : f32 to vector<8x128xf32>
    %213 = arith.mulf %205, %212 : vector<8x128xf32>
    %c2_113 = arith.constant 2 : index
    %c0_114 = arith.constant 0 : index
    %c0_115 = arith.constant 0 : index
    %214 = vector.load %arg5[%c2_113, %c0_114, %c0_115] : memref<8x8x128xf32, #tpu.memory_space<vmem>>, vector<1x8x128xf32>
    %215 = vector.shape_cast %214 : vector<1x8x128xf32> to vector<8x128xf32>
    %216 = vector.shape_cast %211 : vector<8x128xf32> to vector<1x8x128xf32>
    tpu.vector_store %arg5[%c2_113, %c0_114, %c0_115], %216 {strides = array<i32>} : memref<8x8x128xf32, #tpu.memory_space<vmem>>, vector<1x8x128xf32>,
    %217 = vector.extract_strided_slice %175 {offsets = [24, 0], sizes = [8, 128], strides = [1, 1]} : vector<64x128xf32> to vector<8x128xf32>
    %218 = arith.addf %213, %217 : vector<8x128xf32>
    %cst_116 = arith.constant 0.000000e+00 : f32
    %219 = vector.broadcast %cst_116 : f32 to vector<8x128xf32>
    %220 = arith.subf %219, %211 : vector<8x128xf32>
    %221 = arith.addf %220, %218 : vector<8x128xf32>
    %cst_117 = arith.constant 1.000000e-01 : f32
    %222 = vector.broadcast %cst_117 : f32 to vector<8x128xf32>
    %223 = arith.mulf %222, %221 : vector<8x128xf32>
    %224 = arith.addf %211, %223 : vector<8x128xf32>
    %cst_118 = arith.constant 8.000000e-01 : f32
    %225 = vector.broadcast %cst_118 : f32 to vector<8x128xf32>
    %226 = arith.mulf %218, %225 : vector<8x128xf32>
    %c3_119 = arith.constant 3 : index
    %c0_120 = arith.constant 0 : index
    %c0_121 = arith.constant 0 : index
    %227 = vector.load %arg5[%c3_119, %c0_120, %c0_121] : memref<8x8x128xf32, #tpu.memory_space<vmem>>, vector<1x8x128xf32>
    %228 = vector.shape_cast %227 : vector<1x8x128xf32> to vector<8x128xf32>
    %229 = vector.shape_cast %224 : vector<8x128xf32> to vector<1x8x128xf32>
    tpu.vector_store %arg5[%c3_119, %c0_120, %c0_121], %229 {strides = array<i32>} : memref<8x8x128xf32, #tpu.memory_space<vmem>>, vector<1x8x128xf32>,
    %230 = vector.extract_strided_slice %175 {offsets = [32, 0], sizes = [8, 128], strides = [1, 1]} : vector<64x128xf32> to vector<8x128xf32>
    %231 = arith.addf %226, %230 : vector<8x128xf32>
    %cst_122 = arith.constant 0.000000e+00 : f32
    %232 = vector.broadcast %cst_122 : f32 to vector<8x128xf32>
    %233 = arith.subf %232, %224 : vector<8x128xf32>
    %234 = arith.addf %233, %231 : vector<8x128xf32>
    %cst_123 = arith.constant 1.000000e-01 : f32
    %235 = vector.broadcast %cst_123 : f32 to vector<8x128xf32>
    %236 = arith.mulf %235, %234 : vector<8x128xf32>
    %237 = arith.addf %224, %236 : vector<8x128xf32>
    %cst_124 = arith.constant 8.000000e-01 : f32
    %238 = vector.broadcast %cst_124 : f32 to vector<8x128xf32>
    %239 = arith.mulf %231, %238 : vector<8x128xf32>
    %c4_125 = arith.constant 4 : index
    %c0_126 = arith.constant 0 : index
    %c0_127 = arith.constant 0 : index
    %240 = vector.load %arg5[%c4_125, %c0_126, %c0_127] : memref<8x8x128xf32, #tpu.memory_space<vmem>>, vector<1x8x128xf32>
    %241 = vector.shape_cast %240 : vector<1x8x128xf32> to vector<8x128xf32>
    %242 = vector.shape_cast %237 : vector<8x128xf32> to vector<1x8x128xf32>
    tpu.vector_store %arg5[%c4_125, %c0_126, %c0_127], %242 {strides = array<i32>} : memref<8x8x128xf32, #tpu.memory_space<vmem>>, vector<1x8x128xf32>,
    %243 = vector.extract_strided_slice %175 {offsets = [40, 0], sizes = [8, 128], strides = [1, 1]} : vector<64x128xf32> to vector<8x128xf32>
    %244 = arith.addf %239, %243 : vector<8x128xf32>
    %cst_128 = arith.constant 0.000000e+00 : f32
    %245 = vector.broadcast %cst_128 : f32 to vector<8x128xf32>
    %246 = arith.subf %245, %237 : vector<8x128xf32>
    %247 = arith.addf %246, %244 : vector<8x128xf32>
    %cst_129 = arith.constant 1.000000e-01 : f32
    %248 = vector.broadcast %cst_129 : f32 to vector<8x128xf32>
    %249 = arith.mulf %248, %247 : vector<8x128xf32>
    %250 = arith.addf %237, %249 : vector<8x128xf32>
    %cst_130 = arith.constant 8.000000e-01 : f32
    %251 = vector.broadcast %cst_130 : f32 to vector<8x128xf32>
    %252 = arith.mulf %244, %251 : vector<8x128xf32>
    %c5_131 = arith.constant 5 : index
    %c0_132 = arith.constant 0 : index
    %c0_133 = arith.constant 0 : index
    %253 = vector.load %arg5[%c5_131, %c0_132, %c0_133] : memref<8x8x128xf32, #tpu.memory_space<vmem>>, vector<1x8x128xf32>
    %254 = vector.shape_cast %253 : vector<1x8x128xf32> to vector<8x128xf32>
    %255 = vector.shape_cast %250 : vector<8x128xf32> to vector<1x8x128xf32>
    tpu.vector_store %arg5[%c5_131, %c0_132, %c0_133], %255 {strides = array<i32>} : memref<8x8x128xf32, #tpu.memory_space<vmem>>, vector<1x8x128xf32>,
    %256 = vector.extract_strided_slice %175 {offsets = [48, 0], sizes = [8, 128], strides = [1, 1]} : vector<64x128xf32> to vector<8x128xf32>
    %257 = arith.addf %252, %256 : vector<8x128xf32>
    %cst_134 = arith.constant 0.000000e+00 : f32
    %258 = vector.broadcast %cst_134 : f32 to vector<8x128xf32>
    %259 = arith.subf %258, %250 : vector<8x128xf32>
    %260 = arith.addf %259, %257 : vector<8x128xf32>
    %cst_135 = arith.constant 1.000000e-01 : f32
    %261 = vector.broadcast %cst_135 : f32 to vector<8x128xf32>
    %262 = arith.mulf %261, %260 : vector<8x128xf32>
    %263 = arith.addf %250, %262 : vector<8x128xf32>
    %cst_136 = arith.constant 8.000000e-01 : f32
    %264 = vector.broadcast %cst_136 : f32 to vector<8x128xf32>
    %265 = arith.mulf %257, %264 : vector<8x128xf32>
    %c6_137 = arith.constant 6 : index
    %c0_138 = arith.constant 0 : index
    %c0_139 = arith.constant 0 : index
    %266 = vector.load %arg5[%c6_137, %c0_138, %c0_139] : memref<8x8x128xf32, #tpu.memory_space<vmem>>, vector<1x8x128xf32>
    %267 = vector.shape_cast %266 : vector<1x8x128xf32> to vector<8x128xf32>
    %268 = vector.shape_cast %263 : vector<8x128xf32> to vector<1x8x128xf32>
    tpu.vector_store %arg5[%c6_137, %c0_138, %c0_139], %268 {strides = array<i32>} : memref<8x8x128xf32, #tpu.memory_space<vmem>>, vector<1x8x128xf32>,
    %269 = vector.extract_strided_slice %175 {offsets = [56, 0], sizes = [8, 128], strides = [1, 1]} : vector<64x128xf32> to vector<8x128xf32>
    %270 = arith.addf %265, %269 : vector<8x128xf32>
    %cst_140 = arith.constant 0.000000e+00 : f32
    %271 = vector.broadcast %cst_140 : f32 to vector<8x128xf32>
    %272 = arith.subf %271, %263 : vector<8x128xf32>
    %273 = arith.addf %272, %270 : vector<8x128xf32>
    %cst_141 = arith.constant 1.000000e-01 : f32
    %274 = vector.broadcast %cst_141 : f32 to vector<8x128xf32>
    %275 = arith.mulf %274, %273 : vector<8x128xf32>
    %276 = arith.addf %263, %275 : vector<8x128xf32>
    %cst_142 = arith.constant 8.000000e-01 : f32
    %277 = vector.broadcast %cst_142 : f32 to vector<8x128xf32>
    %278 = arith.mulf %270, %277 : vector<8x128xf32>
    %c7_143 = arith.constant 7 : index
    %c0_144 = arith.constant 0 : index
    %c0_145 = arith.constant 0 : index
    %279 = vector.load %arg5[%c7_143, %c0_144, %c0_145] : memref<8x8x128xf32, #tpu.memory_space<vmem>>, vector<1x8x128xf32>
    %280 = vector.shape_cast %279 : vector<1x8x128xf32> to vector<8x128xf32>
    %281 = vector.shape_cast %276 : vector<8x128xf32> to vector<1x8x128xf32>
    tpu.vector_store %arg5[%c7_143, %c0_144, %c0_145], %281 {strides = array<i32>} : memref<8x8x128xf32, #tpu.memory_space<vmem>>, vector<1x8x128xf32>,
    %c0_146 = arith.constant 0 : index
    %c0_147 = arith.constant 0 : index
    %282 = vector.load %arg9[%c0_146, %c0_147] : memref<8x128xf32, #tpu.memory_space<vmem>>, vector<8x128xf32>
    tpu.vector_store %arg9[%c0_146, %c0_147], %276 {strides = array<i32>} : memref<8x128xf32, #tpu.memory_space<vmem>>, vector<8x128xf32>,
    %c0_148 = arith.constant 0 : index
    %c0_149 = arith.constant 0 : index
    %283 = vector.load %arg10[%c0_148, %c0_149] : memref<8x128xf32, #tpu.memory_space<vmem>>, vector<8x128xf32>
    tpu.vector_store %arg10[%c0_148, %c0_149], %278 {strides = array<i32>} : memref<8x128xf32, #tpu.memory_space<vmem>>, vector<8x128xf32>,
    return
  }
  func.func @transform_0(%arg0: i32) -> (i32, i32, i32) {
    %c0_i32 = arith.constant 0 : i32
    %c0_i32_0 = arith.constant 0 : i32
    %c0_i32_1 = arith.constant 0 : i32
    return %arg0, %c0_i32, %c0_i32_0 : i32, i32, i32
  }
  func.func @transform_1(%arg0: i32) -> (i32, i32) {
    %c0_i32 = arith.constant 0 : i32
    %c0_i32_0 = arith.constant 0 : i32
    %c0_i32_1 = arith.constant 0 : i32
    return %c0_i32, %c0_i32_0 : i32, i32
  }
  func.func @transform_2(%arg0: i32) -> (i32, i32) {
    %c0_i32 = arith.constant 0 : i32
    %c0_i32_0 = arith.constant 0 : i32
    %c0_i32_1 = arith.constant 0 : i32
    return %c0_i32, %c0_i32_0 : i32, i32
  }
  func.func @transform_3(%arg0: i32) -> (i32, i32) {
    %c0_i32 = arith.constant 0 : i32
    %c0_i32_0 = arith.constant 0 : i32
    %c0_i32_1 = arith.constant 0 : i32
    return %c0_i32, %c0_i32_0 : i32, i32
  }
  func.func @transform_4(%arg0: i32) -> (i32, i32, i32) {
    %c0_i32 = arith.constant 0 : i32
    %c0_i32_0 = arith.constant 0 : i32
    %c0_i32_1 = arith.constant 0 : i32
    return %arg0, %c0_i32, %c0_i32_0 : i32, i32, i32
  }
}

</mosaic_0001>

<llo_original>
// kernel: snn_forward.1
$region0: #{snn_forward.1}
  #allocation0 [shape = 'u32[]', space=smem, size = 0x4, offset = 0x4, fixed_abs, tag = 'smem constant byte address 0x4 - core index']
  #allocation1 [shape = 'u32[72,128]{1,0:T(1,128)}', space=vmem, size = 0x9000, scoped, tag = 'internal scratch']
  #allocation2 [shape = 'f32[8,128]{1,0:T(8,128)}', space=vmem, size = 0x1000, scoped, tag = 'scratch operand']
  #allocation3 [shape = 'f32[8,128]{1,0:T(8,128)}', space=vmem, size = 0x1000, scoped, tag = 'scratch operand']
  #allocation4 [shape = 'f32[8,128]{1,0:T(8,128)}', space=vmem, size = 0x1000, scoped, tag = 'scratch operand']
  #allocation5 [shape = 'f32[8,128]{1,0:T(8,128)}', space=vmem, size = 0x1000, scoped, tag = 'scratch operand']
  #allocation6 [shape = 'f32[8,128]{1,0:T(8,128)}', space=vmem, size = 0x1000, scoped, tag = 'scratch operand']
  #allocation7 [shape = 'f32[64,128]{1,0:T(8,128)}', space=vmem, size = 0x8000, scoped, tag = 'scratch operand']
  %s0 = inlined_call_operand.vmem [shape: f32[8,8,128], index: 0, kind: input, shape index: {}]
  %s1 = inlined_call_operand.vmem [shape: f32[128,128], index: 1, kind: input, shape index: {}]
  %s2 = inlined_call_operand.vmem [shape: f32[128,128], index: 2, kind: input, shape index: {}]
  %s3 = inlined_call_operand.vmem [shape: f32[1,128], index: 3, kind: input, shape index: {}]
  %s4 = inlined_call_operand.vmem [shape: f32[8,8,128], index: 4, kind: output, shape index: {}]
  %s5 = sld [smem:[#allocation0]]
  $region30: #{snn_forward.1} parent=0
    _
  %s7 = ssub.s32 1, %s5
  %s8 = scalar_select 0, %s7, %s5
  // Predicated region
  $region2: #{snn_forward.1} parent=0 // pred_check
    _
  $region3: #{snn_forward.1} parent=0 // pred_check_branch
    %10 = sbr.rel (0) target = $region5
  $region4: #{snn_forward.1} parent=0 // pred_region
    _
  $region5: #{snn_forward.1} parent=0 // pred_fallthru
    _
  // Predicated region
  $region6: #{snn_forward.1} parent=0 // pred_check
    _
  $region7: #{snn_forward.1} parent=0 // pred_check_branch
    %12 = sbr.rel (0) target = $region9
  $region8: #{snn_forward.1} parent=0 // pred_region
    _
  $region9: #{snn_forward.1} parent=0 // pred_fallthru
    _
  // Predicated region
  $region10: #{snn_forward.1} parent=0 // pred_check
    _
  $region11: #{snn_forward.1} parent=0 // pred_check_branch
    %14 = sbr.rel (0) target = $region13
  $region12: #{snn_forward.1} parent=0 // pred_region
    _
  $region13: #{snn_forward.1} parent=0 // pred_fallthru
    _
  // Predicated region
  $region14: #{snn_forward.1} parent=0 // pred_check
    _
  $region15: #{snn_forward.1} parent=0 // pred_check_branch
    %16 = sbr.rel (0) target = $region17
  $region16: #{snn_forward.1} parent=0 // pred_region
    _
  $region17: #{snn_forward.1} parent=0 // pred_fallthru
    _
  %p17 = scmp.eq.s32.totalorder 0, 0
  // Predicated region
  $region18: #{snn_forward.1} parent=0 // pred_check
    %p18 = pneg %p17
  $region19: #{snn_forward.1} parent=0 // pred_check_branch
    %20 = sbr.rel (%p18) target = $region21
  $region20: #{snn_forward.1} parent=0 // pred_region
    %21 = vst [vmem:[#allocation2] sm:$0xff] 0.0
    %22 = vst [vmem:[#allocation3] sm:$0xff] 0.25
    %23 = vst [vmem:[#allocation4] sm:$0xff] 0.0
    %24 = vst [vmem:[#allocation5] sm:$0xff] 0.0
    %25 = vst [vmem:[#allocation6] sm:$0xff] 0.0
  $region21: #{snn_forward.1} parent=0 // pred_fallthru
    _
  %v26 = vld [vmem:[%s1] sm:$0xff]
  %v27 = vld [vmem:[%s1 + $0x8] sm:$0xff]
  %v28 = vld [vmem:[%s1 + $0x10] sm:$0xff]
  %v29 = vld [vmem:[%s1 + $0x18] sm:$0xff]
  %v30 = vld [vmem:[%s1 + $0x20] sm:$0xff]
  %v31 = vld [vmem:[%s1 + $0x28] sm:$0xff]
  %v32 = vld [vmem:[%s1 + $0x30] sm:$0xff]
  %v33 = vld [vmem:[%s1 + $0x38] sm:$0xff]
  %v34 = vld [vmem:[%s1 + $0x40] sm:$0xff]
  %v35 = vld [vmem:[%s1 + $0x48] sm:$0xff]
  %v36 = vld [vmem:[%s1 + $0x50] sm:$0xff]
  %v37 = vld [vmem:[%s1 + $0x58] sm:$0xff]
  %v38 = vld [vmem:[%s1 + $0x60] sm:$0xff]
  %v39 = vld [vmem:[%s1 + $0x68] sm:$0xff]
  %v40 = vld [vmem:[%s1 + $0x70] sm:$0xff]
  %v41 = vld [vmem:[%s1 + $0x78] sm:$0xff]
  %v42 = vld [vmem:[#allocation2] sm:$0xff]
  %v43 = vld [vmem:[#allocation3] sm:$0xff]
  %v44 = vld [vmem:[#allocation4] sm:$0xff]
  %v45 = vsub.f32 0.25, %v43
  %v46 = vadd.f32 %v45, %v44
  %v47 = vmul.f32 %v46, 0.1
  %v48 = vadd.f32 %v43, %v47
  %v49 = vmul.f32 %v44, 0.8
  %vm50 = vcmp.gt.f32.partialorder %v48, 0.5
  %v51 = vsel %vm50, 1, 0
  %v52 = vcvt.s32.f32 %v51
  %v53 = vld [vmem:[%s0] sm:$0xff]
  %v54 = vadd.f32 %v49, %v53
  %55 = vmatpush.msra.mxu0 %v41
  %56 = vmatpush.msra.mxu0 %v40
  %57 = vmatpush.msra.mxu0 %v39
  %58 = vmatpush.msra.mxu0 %v38
  %59 = vmatpush.msra.mxu0 %v37
  %60 = vmatpush.msra.mxu0 %v36
  %61 = vmatpush.msra.mxu0 %v35
  %62 = vmatpush.msra.mxu0 %v34
  %63 = vmatpush.msra.mxu0 %v33
  %64 = vmatpush.msra.mxu0 %v32
  %65 = vmatpush.msra.mxu0 %v31
  %66 = vmatpush.msra.mxu0 %v30
  %67 = vmatpush.msra.mxu0 %v29
  %68 = vmatpush.msra.mxu0 %v28
  %69 = vmatpush.msra.mxu0 %v27
  %70 = vmatpush.msra.mxu0 %v26
  %71 = vmatmul.f32.gmra.mxu0 %v42
  %v72 = vpop.f32.mrf.mxu0
  %v73 = vadd.f32 0.0, %v72
  %74 = vdwg.mxu0
  %v75 = vadd.f32 %v54, %v73
  %v76 = vsel %vm50, 0.0, %v48
  %77 = vst [vmem:[#allocation7] sm:$0xff] %v52
  %v78 = vsub.f32 0.25, %v76
  %v79 = vadd.f32 %v78, %v75
  %v80 = vmul.f32 %v79, 0.1
  %v81 = vadd.f32 %v76, %v80
  %v82 = vmul.f32 %v75, 0.8
  %vm83 = vcmp.gt.f32.partialorder %v81, 0.5
  %v84 = vsel %vm83, 1, 0
  %v85 = vcvt.s32.f32 %v84
  %s86 = scalar_lea.vmem %s0, 8
  %v87 = vld [vmem:[%s86] sm:$0xff]
  %v88 = vadd.f32 %v82, %v87
  %89 = vmatpush.msra.mxu0 %v41
  %90 = vmatpush.msra.mxu0 %v40
  %91 = vmatpush.msra.mxu0 %v39
  %92 = vmatpush.msra.mxu0 %v38
  %93 = vmatpush.msra.mxu0 %v37
  %94 = vmatpush.msra.mxu0 %v36
  %95 = vmatpush.msra.mxu0 %v35
  %96 = vmatpush.msra.mxu0 %v34
  %97 = vmatpush.msra.mxu0 %v33
  %98 = vmatpush.msra.mxu0 %v32
  %99 = vmatpush.msra.mxu0 %v31
  %100 = vmatpush.msra.mxu0 %v30
  %101 = vmatpush.msra.mxu0 %v29
  %102 = vmatpush.msra.mxu0 %v28
  %103 = vmatpush.msra.mxu0 %v27
  %104 = vmatpush.msra.mxu0 %v26
  %105 = vmatmul.f32.gmra.mxu0 %v52
  %v106 = vpop.f32.mrf.mxu0
  %v107 = vadd.f32 0.0, %v106
  %108 = vdwg.mxu0
  %v109 = vadd.f32 %v88, %v107
  %v110 = vsel %vm83, 0.0, %v81
  %111 = vst [vmem:[#allocation7 + $0x8] sm:$0xff] %v85
  %v112 = vsub.f32 0.25, %v110
  %v113 = vadd.f32 %v112, %v109
  %v114 = vmul.f32 %v113, 0.1
  %v115 = vadd.f32 %v110, %v114
  %v116 = vmul.f32 %v109, 0.8
  %vm117 = vcmp.gt.f32.partialorder %v115, 0.5
  %v118 = vsel %vm117, 1, 0
  %v119 = vcvt.s32.f32 %v118
  %s120 = scalar_lea.vmem %s0, 16
  %v121 = vld [vmem:[%s120] sm:$0xff]
  %v122 = vadd.f32 %v116, %v121
  %123 = vmatpush.msra.mxu0 %v41
  %124 = vmatpush.msra.mxu0 %v40
  %125 = vmatpush.msra.mxu0 %v39
  %126 = vmatpush.msra.mxu0 %v38
  %127 = vmatpush.msra.mxu0 %v37
  %128 = vmatpush.msra.mxu0 %v36
  %129 = vmatpush.msra.mxu0 %v35
  %130 = vmatpush.msra.mxu0 %v34
  %131 = vmatpush.msra.mxu0 %v33
  %132 = vmatpush.msra.mxu0 %v32
  %133 = vmatpush.msra.mxu0 %v31
  %134 = vmatpush.msra.mxu0 %v30
  %135 = vmatpush.msra.mxu0 %v29
  %136 = vmatpush.msra.mxu0 %v28
  %137 = vmatpush.msra.mxu0 %v27
  %138 = vmatpush.msra.mxu0 %v26
  %139 = vmatmul.f32.gmra.mxu0 %v85
  %v140 = vpop.f32.mrf.mxu0
  %v141 = vadd.f32 0.0, %v140
  %142 = vdwg.mxu0
  %v143 = vadd.f32 %v122, %v141
  %v144 = vsel %vm117, 0.0, %v115
  %145 = vst [vmem:[#allocation7 + $0x10] sm:$0xff] %v119
  %v146 = vsub.f32 0.25, %v144
  %v147 = vadd.f32 %v146, %v143
  %v148 = vmul.f32 %v147, 0.1
  %v149 = vadd.f32 %v144, %v148
  %v150 = vmul.f32 %v143, 0.8
  %vm151 = vcmp.gt.f32.partialorder %v149, 0.5
  %v152 = vsel %vm151, 1, 0
  %v153 = vcvt.s32.f32 %v152
  %s154 = scalar_lea.vmem %s0, 24
  %v155 = vld [vmem:[%s154] sm:$0xff]
  %v156 = vadd.f32 %v150, %v155
  %157 = vmatpush.msra.mxu0 %v41
  %158 = vmatpush.msra.mxu0 %v40
  %159 = vmatpush.msra.mxu0 %v39
  %160 = vmatpush.msra.mxu0 %v38
  %161 = vmatpush.msra.mxu0 %v37
  %162 = vmatpush.msra.mxu0 %v36
  %163 = vmatpush.msra.mxu0 %v35
  %164 = vmatpush.msra.mxu0 %v34
  %165 = vmatpush.msra.mxu0 %v33
  %166 = vmatpush.msra.mxu0 %v32
  %167 = vmatpush.msra.mxu0 %v31
  %168 = vmatpush.msra.mxu0 %v30
  %169 = vmatpush.msra.mxu0 %v29
  %170 = vmatpush.msra.mxu0 %v28
  %171 = vmatpush.msra.mxu0 %v27
  %172 = vmatpush.msra.mxu0 %v26
  %173 = vmatmul.f32.gmra.mxu0 %v119
  %v174 = vpop.f32.mrf.mxu0
  %v175 = vadd.f32 0.0, %v174
  %176 = vdwg.mxu0
  %v177 = vadd.f32 %v156, %v175
  %v178 = vsel %vm151, 0.0, %v149
  %179 = vst [vmem:[#allocation7 + $0x18] sm:$0xff] %v153
  %v180 = vsub.f32 0.25, %v178
  %v181 = vadd.f32 %v180, %v177
  %v182 = vmul.f32 %v181, 0.1
  %v183 = vadd.f32 %v178, %v182
  %v184 = vmul.f32 %v177, 0.8
  %vm185 = vcmp.gt.f32.partialorder %v183, 0.5
  %v186 = vsel %vm185, 1, 0
  %v187 = vcvt.s32.f32 %v186
  %s188 = scalar_lea.vmem %s0, 32
  %v189 = vld [vmem:[%s188] sm:$0xff]
  %v190 = vadd.f32 %v184, %v189
  %191 = vmatpush.msra.mxu0 %v41
  %192 = vmatpush.msra.mxu0 %v40
  %193 = vmatpush.msra.mxu0 %v39
  %194 = vmatpush.msra.mxu0 %v38
  %195 = vmatpush.msra.mxu0 %v37
  %196 = vmatpush.msra.mxu0 %v36
  %197 = vmatpush.msra.mxu0 %v35
  %198 = vmatpush.msra.mxu0 %v34
  %199 = vmatpush.msra.mxu0 %v33
  %200 = vmatpush.msra.mxu0 %v32
  %201 = vmatpush.msra.mxu0 %v31
  %202 = vmatpush.msra.mxu0 %v30
  %203 = vmatpush.msra.mxu0 %v29
  %204 = vmatpush.msra.mxu0 %v28
  %205 = vmatpush.msra.mxu0 %v27
  %206 = vmatpush.msra.mxu0 %v26
  %207 = vmatmul.f32.gmra.mxu0 %v153
  %v208 = vpop.f32.mrf.mxu0
  %v209 = vadd.f32 0.0, %v208
  %210 = vdwg.mxu0
  %v211 = vadd.f32 %v190, %v209
  %v212 = vsel %vm185, 0.0, %v183
  %213 = vst [vmem:[#allocation7 + $0x20] sm:$0xff] %v187
  %v214 = vsub.f32 0.25, %v212
  %v215 = vadd.f32 %v214, %v211
  %v216 = vmul.f32 %v215, 0.1
  %v217 = vadd.f32 %v212, %v216
  %v218 = vmul.f32 %v211, 0.8
  %vm219 = vcmp.gt.f32.partialorder %v217, 0.5
  %v220 = vsel %vm219, 1, 0
  %v221 = vcvt.s32.f32 %v220
  %s222 = scalar_lea.vmem %s0, 40
  %v223 = vld [vmem:[%s222] sm:$0xff]
  %v224 = vadd.f32 %v218, %v223
  %225 = vmatpush.msra.mxu0 %v41
  %226 = vmatpush.msra.mxu0 %v40
  %227 = vmatpush.msra.mxu0 %v39
  %228 = vmatpush.msra.mxu0 %v38
  %229 = vmatpush.msra.mxu0 %v37
  %230 = vmatpush.msra.mxu0 %v36
  %231 = vmatpush.msra.mxu0 %v35
  %232 = vmatpush.msra.mxu0 %v34
  %233 = vmatpush.msra.mxu0 %v33
  %234 = vmatpush.msra.mxu0 %v32
  %235 = vmatpush.msra.mxu0 %v31
  %236 = vmatpush.msra.mxu0 %v30
  %237 = vmatpush.msra.mxu0 %v29
  %238 = vmatpush.msra.mxu0 %v28
  %239 = vmatpush.msra.mxu0 %v27
  %240 = vmatpush.msra.mxu0 %v26
  %241 = vmatmul.f32.gmra.mxu0 %v187
  %v242 = vpop.f32.mrf.mxu0
  %v243 = vadd.f32 0.0, %v242
  %244 = vdwg.mxu0
  %v245 = vadd.f32 %v224, %v243
  %v246 = vsel %vm219, 0.0, %v217
  %247 = vst [vmem:[#allocation7 + $0x28] sm:$0xff] %v221
  %v248 = vsub.f32 0.25, %v246
  %v249 = vadd.f32 %v248, %v245
  %v250 = vmul.f32 %v249, 0.1
  %v251 = vadd.f32 %v246, %v250
  %v252 = vmul.f32 %v245, 0.8
  %vm253 = vcmp.gt.f32.partialorder %v251, 0.5
  %v254 = vsel %vm253, 1, 0
  %v255 = vcvt.s32.f32 %v254
  %s256 = scalar_lea.vmem %s0, 48
  %v257 = vld [vmem:[%s256] sm:$0xff]
  %v258 = vadd.f32 %v252, %v257
  %259 = vmatpush.msra.mxu0 %v41
  %260 = vmatpush.msra.mxu0 %v40
  %261 = vmatpush.msra.mxu0 %v39
  %262 = vmatpush.msra.mxu0 %v38
  %263 = vmatpush.msra.mxu0 %v37
  %264 = vmatpush.msra.mxu0 %v36
  %265 = vmatpush.msra.mxu0 %v35
  %266 = vmatpush.msra.mxu0 %v34
  %267 = vmatpush.msra.mxu0 %v33
  %268 = vmatpush.msra.mxu0 %v32
  %269 = vmatpush.msra.mxu0 %v31
  %270 = vmatpush.msra.mxu0 %v30
  %271 = vmatpush.msra.mxu0 %v29
  %272 = vmatpush.msra.mxu0 %v28
  %273 = vmatpush.msra.mxu0 %v27
  %274 = vmatpush.msra.mxu0 %v26
  %275 = vmatmul.f32.gmra.mxu0 %v221
  %v276 = vpop.f32.mrf.mxu0
  %v277 = vadd.f32 0.0, %v276
  %278 = vdwg.mxu0
  %v279 = vadd.f32 %v258, %v277
  %v280 = vsel %vm253, 0.0, %v251
  %281 = vst [vmem:[#allocation7 + $0x30] sm:$0xff] %v255
  %v282 = vsub.f32 0.25, %v280
  %v283 = vadd.f32 %v282, %v279
  %v284 = vmul.f32 %v283, 0.1
  %v285 = vadd.f32 %v280, %v284
  %v286 = vmul.f32 %v279, 0.8
  %vm287 = vcmp.gt.f32.partialorder %v285, 0.5
  %v288 = vsel %vm287, 1, 0
  %v289 = vcvt.s32.f32 %v288
  %s290 = scalar_lea.vmem %s0, 56
  %v291 = vld [vmem:[%s290] sm:$0xff]
  %v292 = vadd.f32 %v286, %v291
  %293 = vmatpush.msra.mxu0 %v41
  %294 = vmatpush.msra.mxu0 %v40
  %295 = vmatpush.msra.mxu0 %v39
  %296 = vmatpush.msra.mxu0 %v38
  %297 = vmatpush.msra.mxu0 %v37
  %298 = vmatpush.msra.mxu0 %v36
  %299 = vmatpush.msra.mxu0 %v35
  %300 = vmatpush.msra.mxu0 %v34
  %301 = vmatpush.msra.mxu0 %v33
  %302 = vmatpush.msra.mxu0 %v32
  %303 = vmatpush.msra.mxu0 %v31
  %304 = vmatpush.msra.mxu0 %v30
  %305 = vmatpush.msra.mxu0 %v29
  %306 = vmatpush.msra.mxu0 %v28
  %307 = vmatpush.msra.mxu0 %v27
  %308 = vmatpush.msra.mxu0 %v26
  %309 = vmatmul.f32.gmra.mxu0 %v255
  %v310 = vpop.f32.mrf.mxu0
  %v311 = vadd.f32 0.0, %v310
  %312 = vdwg.mxu0
  %v313 = vadd.f32 %v292, %v311
  %v314 = vsel %vm287, 0.0, %v285
  %315 = vst [vmem:[#allocation7 + $0x38] sm:$0xff] %v289
  %316 = vst [vmem:[#allocation2] sm:$0xff] %v289
  %317 = vst [vmem:[#allocation3] sm:$0xff] %v314
  %318 = vst [vmem:[#allocation4] sm:$0xff] %v313
  %v319 = vld [vmem:[#allocation7] sm:$0xff]
  %v320 = vld [vmem:[#allocation7 + $0x8] sm:$0xff]
  %v321 = vld [vmem:[#allocation7 + $0x10] sm:$0xff]
  %v322 = vld [vmem:[#allocation7 + $0x18] sm:$0xff]
  %v323 = vld [vmem:[#allocation7 + $0x20] sm:$0xff]
  %v324 = vld [vmem:[#allocation7 + $0x28] sm:$0xff]
  %v325 = vld [vmem:[#allocation7 + $0x30] sm:$0xff]
  %v326 = vld [vmem:[#allocation7 + $0x38] sm:$0xff]
  %v327 = vld [vmem:[%s2] sm:$0xff]
  %v328 = vld [vmem:[%s2 + $0x8] sm:$0xff]
  %v329 = vld [vmem:[%s2 + $0x10] sm:$0xff]
  %v330 = vld [vmem:[%s2 + $0x18] sm:$0xff]
  %v331 = vld [vmem:[%s2 + $0x20] sm:$0xff]
  %v332 = vld [vmem:[%s2 + $0x28] sm:$0xff]
  %v333 = vld [vmem:[%s2 + $0x30] sm:$0xff]
  %v334 = vld [vmem:[%s2 + $0x38] sm:$0xff]
  %v335 = vld [vmem:[%s2 + $0x40] sm:$0xff]
  %v336 = vld [vmem:[%s2 + $0x48] sm:$0xff]
  %v337 = vld [vmem:[%s2 + $0x50] sm:$0xff]
  %v338 = vld [vmem:[%s2 + $0x58] sm:$0xff]
  %v339 = vld [vmem:[%s2 + $0x60] sm:$0xff]
  %v340 = vld [vmem:[%s2 + $0x68] sm:$0xff]
  %v341 = vld [vmem:[%s2 + $0x70] sm:$0xff]
  %v342 = vld [vmem:[%s2 + $0x78] sm:$0xff]
  %v343 = vld [vmem:[%s3] sm:$0x1]
  %v345 = vperm.slane %v343, 0
  %347 = vmatpush.msra.mxu0 %v342
  %348 = vmatpush.msra.mxu0 %v341
  %349 = vmatpush.msra.mxu0 %v340
  %350 = vmatpush.msra.mxu0 %v339
  %351 = vmatpush.msra.mxu0 %v338
  %352 = vmatpush.msra.mxu0 %v337
  %353 = vmatpush.msra.mxu0 %v336
  %354 = vmatpush.msra.mxu0 %v335
  %355 = vmatpush.msra.mxu0 %v334
  %356 = vmatpush.msra.mxu0 %v333
  %357 = vmatpush.msra.mxu0 %v332
  %358 = vmatpush.msra.mxu0 %v331
  %359 = vmatpush.msra.mxu0 %v330
  %360 = vmatpush.msra.mxu0 %v329
  %361 = vmatpush.msra.mxu0 %v328
  %362 = vmatpush.msra.mxu0 %v327
  %363 = vmatmul.f32.gmra.mxu0 %v319
  %v364 = vpop.f32.mrf.mxu0
  %v365 = vadd.f32 %v345, %v364
  %366 = vmatmul.f32.gmra.mxu0 %v320
  %v367 = vpop.f32.mrf.mxu0
  %v368 = vadd.f32 %v345, %v367
  %369 = vmatmul.f32.gmra.mxu0 %v321
  %v370 = vpop.f32.mrf.mxu0
  %v371 = vadd.f32 %v345, %v370
  %372 = vmatmul.f32.gmra.mxu0 %v322
  %v373 = vpop.f32.mrf.mxu0
  %v374 = vadd.f32 %v345, %v373
  %375 = vmatmul.f32.gmra.mxu0 %v323
  %v376 = vpop.f32.mrf.mxu0
  %v377 = vadd.f32 %v345, %v376
  %378 = vmatmul.f32.gmra.mxu0 %v324
  %v379 = vpop.f32.mrf.mxu0
  %v380 = vadd.f32 %v345, %v379
  %381 = vmatmul.f32.gmra.mxu0 %v325
  %v382 = vpop.f32.mrf.mxu0
  %v383 = vadd.f32 %v345, %v382
  %384 = vmatmul.f32.gmra.mxu0 %v326
  %v385 = vpop.f32.mrf.mxu0
  %v386 = vadd.f32 %v345, %v385
  %387 = vdwg.mxu0
  %v388 = vld [vmem:[#allocation5] sm:$0xff]
  %v389 = vld [vmem:[#allocation6] sm:$0xff]
  %v390 = vadd.f32 %v389, %v365
  %v391 = vsub.f32 0.0, %v388
  %v392 = vadd.f32 %v391, %v390
  %v393 = vmul.f32 %v392, 0.1
  %v394 = vadd.f32 %v388, %v393
  %v395 = vmul.f32 %v390, 0.8
  %396 = vst [vmem:[%s4] sm:$0xff] %v394
  %v397 = vadd.f32 %v395, %v368
  %v398 = vsub.f32 0.0, %v394
  %v399 = vadd.f32 %v398, %v397
  %v400 = vmul.f32 %v399, 0.1
  %v401 = vadd.f32 %v394, %v400
  %v402 = vmul.f32 %v397, 0.8
  %s403 = scalar_lea.vmem %s4, 8
  %404 = vst [vmem:[%s403] sm:$0xff] %v401
  %v405 = vadd.f32 %v402, %v371
  %v406 = vsub.f32 0.0, %v401
  %v407 = vadd.f32 %v406, %v405
  %v408 = vmul.f32 %v407, 0.1
  %v409 = vadd.f32 %v401, %v408
  %v410 = vmul.f32 %v405, 0.8
  %s411 = scalar_lea.vmem %s4, 16
  %412 = vst [vmem:[%s411] sm:$0xff] %v409
  %v413 = vadd.f32 %v410, %v374
  %v414 = vsub.f32 0.0, %v409
  %v415 = vadd.f32 %v414, %v413
  %v416 = vmul.f32 %v415, 0.1
  %v417 = vadd.f32 %v409, %v416
  %v418 = vmul.f32 %v413, 0.8
  %s419 = scalar_lea.vmem %s4, 24
  %420 = vst [vmem:[%s419] sm:$0xff] %v417
  %v421 = vadd.f32 %v418, %v377
  %v422 = vsub.f32 0.0, %v417
  %v423 = vadd.f32 %v422, %v421
  %v424 = vmul.f32 %v423, 0.1
  %v425 = vadd.f32 %v417, %v424
  %v426 = vmul.f32 %v421, 0.8
  %s427 = scalar_lea.vmem %s4, 32
  %428 = vst [vmem:[%s427] sm:$0xff] %v425
  %v429 = vadd.f32 %v426, %v380
  %v430 = vsub.f32 0.0, %v425
  %v431 = vadd.f32 %v430, %v429
  %v432 = vmul.f32 %v431, 0.1
  %v433 = vadd.f32 %v425, %v432
  %v434 = vmul.f32 %v429, 0.8
  %s435 = scalar_lea.vmem %s4, 40
  %436 = vst [vmem:[%s435] sm:$0xff] %v433
  %v437 = vadd.f32 %v434, %v383
  %v438 = vsub.f32 0.0, %v433
  %v439 = vadd.f32 %v438, %v437
  %v440 = vmul.f32 %v439, 0.1
  %v441 = vadd.f32 %v433, %v440
  %v442 = vmul.f32 %v437, 0.8
  %s443 = scalar_lea.vmem %s4, 48
  %444 = vst [vmem:[%s443] sm:$0xff] %v441
  %v445 = vadd.f32 %v442, %v386
  %v446 = vsub.f32 0.0, %v441
  %v447 = vadd.f32 %v446, %v445
  %v448 = vmul.f32 %v447, 0.1
  %v449 = vadd.f32 %v441, %v448
  %v450 = vmul.f32 %v445, 0.8
  %s451 = scalar_lea.vmem %s4, 56
  %452 = vst [vmem:[%s451] sm:$0xff] %v449
  %453 = vst [vmem:[#allocation5] sm:$0xff] %v449
  %454 = vst [vmem:[#allocation6] sm:$0xff] %v450
  // Predicated region
  $region22: #{snn_forward.1} parent=0 // pred_check
    _
  $region23: #{snn_forward.1} parent=0 // pred_check_branch
    %456 = sbr.rel (0) target = $region25
  $region24: #{snn_forward.1} parent=0 // pred_region
    _
  $region25: #{snn_forward.1} parent=0 // pred_fallthru
    _
  // Predicated region
  $region26: #{snn_forward.1} parent=0 // pred_check
    _
  $region27: #{snn_forward.1} parent=0 // pred_check_branch
    %458 = sbr.rel (0) target = $region29
  $region28: #{snn_forward.1} parent=0 // pred_region
    _
  $region29: #{snn_forward.1} parent=0 // pred_fallthru
    _

</llo_original>
